<compile_context>
chip_gen: v7x
topology: tpu7x:2x2x1
jax: 0.10.0
libtpu: 0.0.40
codegen_flags: <defaults>
</compile_context>

<pallas_src>
import functools

import jax
import jax.numpy as jnp
from jax import lax
from jax.experimental import pallas as pl
from jax.experimental.pallas import tpu as pltpu


def _round_up(x, m):
    return ((x + m - 1) // m) * m


# ----------------------------------------------------------------------------
# Kernel body: one big matmul + bit-decomposed circular-roll shift per step.
# ----------------------------------------------------------------------------
def _rel_pos_emb_kernel(q_ref, w_ref, o_ref, *, i, j, w_pad):
    b_sub, rows, d = q_ref.shape
    mb = b_sub * rows

    q = q_ref[...].reshape(mb, d)            # merge leading dims (free: rows%8==0
    w = w_ref[...]                           # or b_sub==1); w: (w_pad, d), pre-scaled

    # One MXU matmul per grid step: (mb, d) x (d, w_pad) -> (mb, w_pad), f32 acc.
    # Columns j..w_pad-1 of w are zero, so the slab is already zero-padded.
    x = lax.dot_general(q, w, (((1,), (1,)), ((), ())),
                        preferred_element_type=jnp.float32)

    # Relative-position shift: row m (r = m % i within its chunk) needs
    # out[m, k] = x[m, k + (i - 1 - r)], i.e. a circular LEFT roll by
    # a = i - 1 - r.  Decompose a into bits: O(log i) XLU rolls + VPU selects.
    row = lax.broadcasted_iota(jnp.int32, (mb, 1), 0)
    a = (i - 1) - (row % i)                  # per-row left-shift amount in [0, i-1]
    nbits = (i - 1).bit_length()
    masks = [(a & (1 << p)) != 0 for p in range(nbits)]   # precomputed (VPU trim)
    for p in range(nbits):
        amt = 1 << p
        # np.roll sign convention: shift of (w_pad - amt) == circular LEFT by amt.
        rolled = pltpu.roll(x, shift=w_pad - amt, axis=1)
        x = jnp.where(masks[p], rolled, x)

    # Out-of-range positions land in the zero padding -> correct zeros.
    o_ref[...] = x[:, :j].astype(o_ref.dtype).reshape(b_sub, rows, j)


# ----------------------------------------------------------------------------
# VMEM footprint / tiling selection.
# ----------------------------------------------------------------------------
def _step_bytes(b_sub, n_sub, i, j, d, w_pad, itemsize):
    """Peak per-step working set: double-buffered q/out streams, ~3 live
    (mb, w_pad) f32 slabs inside the shift loop, resident padded weights."""
    rows = n_sub * i
    mb = b_sub * rows
    return (2 * mb * (d + j) * itemsize      # double-buffered q + out blocks
            + 3 * mb * w_pad * 4             # x / rolled / select-result f32 slabs
            + 2 * w_pad * d * itemsize)      # resident (w_pad, d) weight tile


def _pick_tiling(b, n, i, j, d, w_pad, itemsize, budget_bytes):
    """Pick (b_sub, n_sub): largest blocks whose footprint fits the budget."""
    def rows_ok(ns):
        # (8,128) rule: second-to-last block dim must be a multiple of 8 or
        # equal the full extent (n*i).
        return (ns * i) % 8 == 0 or ns == n

    valid = [ns for ns in range(1, n + 1) if n % ns == 0 and rows_ok(ns)]
    # `ns == n` is always valid, so `valid` is never empty.
    n_sub = None
    for ns in sorted(valid, reverse=True):
        if _step_bytes(1, ns, i, j, d, w_pad, itemsize) <= budget_bytes:
            n_sub = ns
            break
    if n_sub is None:
        # Budget-respecting fallback: smallest valid divisor (never blindly n).
        n_sub = min(valid)

    # Fold batch entries into the block when per-(b, h) work is small.
    b_sub = 1
    rows = n_sub * i
    if n_sub == n and (rows % 8 == 0 or b == 1):
        for bs in sorted((x for x in range(1, b + 1) if b % x == 0), reverse=True):
            if _step_bytes(bs, n_sub, i, j, d, w_pad, itemsize) <= budget_bytes:
                b_sub = bs
                break
    return b_sub, n_sub


def _vmem_budget():
    """Per-generation block budget + scoped-VMEM limit headroom."""
    try:
        vmem_cap = int(pltpu.get_tpu_info().vmem_capacity_bytes)
    except Exception:
        vmem_cap = 64 * 1024 * 1024          # conservative (v7x-sized)
    if vmem_cap >= 100 * 1024 * 1024:        # v5e / v6e: 128 MiB physical
        budget = 40 * 1024 * 1024
    else:                                    # v7x: 64 MiB physical
        budget = 22 * 1024 * 1024
    return vmem_cap, budget


# ----------------------------------------------------------------------------
# Wrapper.
# ----------------------------------------------------------------------------
def relative_positional_embedding(q, weights):
    """q: (b, h, n, i, d); weights: (length=j, heads=h, dim=d) as in torch."""
    b, h, n, i, d = q.shape
    j = weights.shape[0]
    itemsize = q.dtype.itemsize
    scale = float(d) ** -0.5
    w_pad = _round_up(max(i + j - 1, 1), 128)

    # Pre-scale + pre-pad the (tiny) weights: (j, h, d) -> (h, w_pad, d) with
    # zeros in rows j..w_pad-1, so the matmul emits the lane-dense slab
    # directly and the per-step scale multiply disappears.
    w_hjd = jnp.transpose(weights.astype(jnp.float32) * scale, (1, 0, 2))
    w_hwd = jnp.concatenate(
        [w_hjd, jnp.zeros((h, w_pad - j, d), jnp.float32)], axis=1
    ).astype(q.dtype)

    vmem_cap, budget = _vmem_budget()
    b_sub, n_sub = _pick_tiling(b, n, i, j, d, w_pad, itemsize, budget)
    b_tiles = b // b_sub
    n_tiles = n // n_sub
    rows = n_sub * i
    m_tot = n * i

    # Fold (n, i) -> M so each grid step handles a big, contiguous slab.
    q2 = q.reshape(b, h, m_tot, d)

    footprint = _step_bytes(b_sub, n_sub, i, j, d, w_pad, itemsize)
    vmem_limit = int(min(max(vmem_cap - (8 << 20), footprint + (4 << 20)),
                         max(32 << 20, footprint + (16 << 20))))

    kernel = functools.partial(_rel_pos_emb_kernel, i=i, j=j, w_pad=w_pad)

    # v7x megacore balance: prefer an even outermost parallel axis.  The
    # per-head (w_pad, d) weight tile is tiny, so losing residency is fine.
    h_outer = (h % 2 == 0) or (b_tiles % 2 != 0)
    if h_outer:
        grid = (h, b_tiles, n_tiles)
        q_map = lambda hi, bi, ti: (bi, hi, ti, 0)
        w_map = lambda hi, bi, ti: (hi, 0, 0)
        o_map = lambda hi, bi, ti: (bi, hi, ti, 0)
    else:
        grid = (b_tiles, h, n_tiles)
        q_map = lambda bi, hi, ti: (bi, hi, ti, 0)
        w_map = lambda bi, hi, ti: (hi, 0, 0)
        o_map = lambda bi, hi, ti: (bi, hi, ti, 0)

    cost = pl.CostEstimate(
        flops=2 * b * h * n * i * d * j,
        transcendentals=0,
        bytes_accessed=(q2.size * itemsize + w_hwd.size * itemsize
                        + b * h * m_tot * j * itemsize),
    )

    out = pl.pallas_call(
        kernel,
        out_shape=jax.ShapeDtypeStruct((b, h, m_tot, j), q.dtype),
        grid_spec=pl.GridSpec(
            grid=grid,
            in_specs=[
                pl.BlockSpec((b_sub, None, rows, d), q_map),
                pl.BlockSpec((None, w_pad, d), w_map),
            ],
            out_specs=pl.BlockSpec((b_sub, None, rows, j), o_map),
        ),
        compiler_params=pltpu.CompilerParams(
            dimension_semantics=("parallel", "parallel", "parallel"),
            vmem_limit_bytes=vmem_limit),
        cost_estimate=cost,
    )(q2, w_hwd)

    return out.reshape(b, h, n, i, j)


# ---- pure-JAX reference (mirrors the torch code) for a correctness check ----
def _shift_ref(x):
    *lead, i, j = x.shape
    x = jnp.concatenate([x, jnp.zeros((*lead, i, i), x.dtype)], axis=-1)
    l = i + j - 1
    x = x.reshape(*lead, -1)
    pad = (-x.shape[-1]) % l
    x = jnp.concatenate([x, jnp.zeros((*lead, pad), x.dtype)], axis=-1)
    shifted = x.reshape(*lead, -1, l)
    return shifted[..., :i, i - 1:]


def _reference(q, weights):
    d = q.shape[-1]
    emb = jnp.einsum('bhnid,jhd->bhnij', q, weights.astype(q.dtype)) * (float(d) ** -0.5)
    return _shift_ref(emb)


if __name__ == "__main__":
    key = jax.random.PRNGKey(0)

    # Case 1: small shapes consistent with the module's forward.
    b, h, n, i, d = 2, 4, 2, 8, 32
    length = 16  # j
    kq, kw, key = jax.random.split(key, 3)
    q = jax.random.normal(kq, (b, h, n, i, d), dtype=jnp.float32)
    weights = jax.random.normal(kw, (length, h, d), dtype=jnp.float32)

    out = jax.block_until_ready(relative_positional_embedding(q, weights))
    ref = _reference(q, weights)
    assert out.shape == (b, h, n, i, length), out.shape
    assert jnp.allclose(out, ref, rtol=2e-2, atol=2e-2)

    # Case 2: non-power-of-two i, i+j-1 just above a multiple of 128
    # (locks in the roll sign convention + padding math).
    b2, h2, n2, i2, d2, j2 = 1, 2, 3, 12, 32, 120
    kq2, kw2, key = jax.random.split(key, 3)
    q2 = jax.random.normal(kq2, (b2, h2, n2, i2, d2), dtype=jnp.float32)
    w2 = jax.random.normal(kw2, (j2, h2, d2), dtype=jnp.float32)
    out2 = jax.block_until_ready(relative_positional_embedding(q2, w2))
    ref2 = _reference(q2, w2)
    assert out2.shape == (b2, h2, n2, i2, j2), out2.shape
    assert jnp.allclose(out2, ref2, rtol=2e-2, atol=2e-2)

    print("KERNEL_OK")
</pallas_src>

<mosaic_0001>
module attributes {stable_mosaic.version = 11 : i64} {
  func.func @_rel_pos_emb_kernel(%arg0: i32, %arg1: i32, %arg2: i32, %arg3: memref<2x1x16x32xf32, #tpu.memory_space<vmem>>, %arg4: memref<1x128x32xf32, #tpu.memory_space<vmem>>, %arg5: memref<2x1x16x16xf32, #tpu.memory_space<vmem>>) attributes {dimension_semantics = [#tpu.dimension_semantics<parallel>, #tpu.dimension_semantics<parallel>, #tpu.dimension_semantics<parallel>], iteration_bounds = array<i64: 4, 1, 1>, scalar_prefetch = 0 : i64, scratch_operands = 0 : i64, tpu.core_type = #tpu.core_type<tc>, window_params = [{transform_indices = @transform_0, window_bounds = array<i64: 2, 1, 16, 32>}, {transform_indices = @transform_1, window_bounds = array<i64: 1, 128, 32>}, {transform_indices = @transform_2, window_bounds = array<i64: 2, 1, 16, 16>}]} {
    %c0 = arith.constant 0 : index
    %c0_0 = arith.constant 0 : index
    %c0_1 = arith.constant 0 : index
    %c0_2 = arith.constant 0 : index
    %0 = vector.load %arg3[%c0, %c0_0, %c0_1, %c0_2] : memref<2x1x16x32xf32, #tpu.memory_space<vmem>>, vector<2x1x16x32xf32>
    %1 = vector.shape_cast %0 : vector<2x1x16x32xf32> to vector<2x16x32xf32>
    %2 = vector.shape_cast %1 : vector<2x16x32xf32> to vector<32x32xf32>
    %c0_3 = arith.constant 0 : index
    %c0_4 = arith.constant 0 : index
    %c0_5 = arith.constant 0 : index
    %3 = vector.load %arg4[%c0_3, %c0_4, %c0_5] : memref<1x128x32xf32, #tpu.memory_space<vmem>>, vector<1x128x32xf32>
    %4 = vector.shape_cast %3 : vector<1x128x32xf32> to vector<128x32xf32>
    %cst = arith.constant dense<0.000000e+00> : vector<32x128xf32>
    %5 = tpu.matmul %2, %4, %cst {dimension_numbers = #tpu.dot_dimension_numbers<[1], [1], [0], [0], [0, 0, 1, 0], [], []>} : vector<32x32xf32>, vector<128x32xf32>, vector<32x128xf32> -> vector<32x128xf32>
    %6 = tpu.iota {dimensions = array<i32: 0>} : vector<32x1xi32>
    %c8_i32 = arith.constant 8 : i32
    %c0_i32 = arith.constant 0 : i32
    %7 = arith.cmpi eq, %c8_i32, %c0_i32 : i32
    %c1_i32 = arith.constant 1 : i32
    %8 = arith.select %7, %c1_i32, %c8_i32 : i32
    %9 = vector.broadcast %8 : i32 to vector<32x1xi32>
    %10 = arith.remsi %6, %9 : vector<32x1xi32>
    %c0_i32_6 = arith.constant 0 : i32
    %11 = vector.broadcast %c0_i32_6 : i32 to vector<32x1xi32>
    %12 = arith.cmpi ne, %10, %11 : vector<32x1xi32>
    %c0_i32_7 = arith.constant 0 : i32
    %13 = vector.broadcast %c0_i32_7 : i32 to vector<32x1xi32>
    %14 = arith.cmpi slt, %10, %13 : vector<32x1xi32>
    %c0_i32_8 = arith.constant 0 : i32
    %15 = arith.cmpi slt, %8, %c0_i32_8 : i32
    %16 = vector.broadcast %15 : i1 to vector<32x1xi1>
    %17 = vector.broadcast %16 : vector<32x1xi1> to vector<32x1xi1>
    %18 = arith.xori %14, %17 : vector<32x1xi1>
    %19 = arith.andi %18, %12 : vector<32x1xi1>
    %20 = vector.broadcast %8 : i32 to vector<32x1xi32>
    %21 = arith.addi %10, %20 : vector<32x1xi32>
    %22 = arith.select %19, %21, %10 : vector<32x1xi1>, vector<32x1xi32>
    %c7_i32 = arith.constant 7 : i32
    %23 = vector.broadcast %c7_i32 : i32 to vector<32x1xi32>
    %24 = arith.subi %23, %22 : vector<32x1xi32>
    %c1_i32_9 = arith.constant 1 : i32
    %25 = vector.broadcast %c1_i32_9 : i32 to vector<32x1xi32>
    %26 = arith.andi %24, %25 : vector<32x1xi32>
    %c0_i32_10 = arith.constant 0 : i32
    %27 = vector.broadcast %c0_i32_10 : i32 to vector<32x1xi32>
    %28 = arith.cmpi ne, %26, %27 : vector<32x1xi32>
    %c2_i32 = arith.constant 2 : i32
    %29 = vector.broadcast %c2_i32 : i32 to vector<32x1xi32>
    %30 = arith.andi %24, %29 : vector<32x1xi32>
    %c0_i32_11 = arith.constant 0 : i32
    %31 = vector.broadcast %c0_i32_11 : i32 to vector<32x1xi32>
    %32 = arith.cmpi ne, %30, %31 : vector<32x1xi32>
    %c4_i32 = arith.constant 4 : i32
    %33 = vector.broadcast %c4_i32 : i32 to vector<32x1xi32>
    %34 = arith.andi %24, %33 : vector<32x1xi32>
    %c0_i32_12 = arith.constant 0 : i32
    %35 = vector.broadcast %c0_i32_12 : i32 to vector<32x1xi32>
    %36 = arith.cmpi ne, %34, %35 : vector<32x1xi32>
    %c127_i32 = arith.constant 127 : i32
    %37 = tpu.dynamic_rotate %5 by %c127_i32 dim 1 : vector<32x128xf32>, i32 -> vector<32x128xf32>
    %38 = vector.shape_cast %28 : vector<32x1xi1> to vector<32x1xi1>
    %39 = vector.broadcast %38 : vector<32x1xi1> to vector<32x128xi1>
    %40 = arith.select %39, %37, %5 : vector<32x128xi1>, vector<32x128xf32>
    %c126_i32 = arith.constant 126 : i32
    %41 = tpu.dynamic_rotate %40 by %c126_i32 dim 1 : vector<32x128xf32>, i32 -> vector<32x128xf32>
    %42 = vector.shape_cast %32 : vector<32x1xi1> to vector<32x1xi1>
    %43 = vector.broadcast %42 : vector<32x1xi1> to vector<32x128xi1>
    %44 = arith.select %43, %41, %40 : vector<32x128xi1>, vector<32x128xf32>
    %c124_i32 = arith.constant 124 : i32
    %45 = tpu.dynamic_rotate %44 by %c124_i32 dim 1 : vector<32x128xf32>, i32 -> vector<32x128xf32>
    %46 = vector.shape_cast %36 : vector<32x1xi1> to vector<32x1xi1>
    %47 = vector.broadcast %46 : vector<32x1xi1> to vector<32x128xi1>
    %48 = arith.select %47, %45, %44 : vector<32x128xi1>, vector<32x128xf32>
    %49 = vector.extract_strided_slice %48 {offsets = [0, 0], sizes = [32, 16], strides = [1, 1]} : vector<32x128xf32> to vector<32x16xf32>
    %50 = vector.shape_cast %49 : vector<32x16xf32> to vector<2x16x16xf32>
    %c0_13 = arith.constant 0 : index
    %c0_14 = arith.constant 0 : index
    %c0_15 = arith.constant 0 : index
    %c0_16 = arith.constant 0 : index
    %51 = vector.load %arg5[%c0_13, %c0_14, %c0_15, %c0_16] : memref<2x1x16x16xf32, #tpu.memory_space<vmem>>, vector<2x1x16x16xf32>
    %52 = vector.shape_cast %51 : vector<2x1x16x16xf32> to vector<2x16x16xf32>
    %53 = vector.shape_cast %50 : vector<2x16x16xf32> to vector<2x1x16x16xf32>
    tpu.vector_store %arg5[%c0_13, %c0_14, %c0_15, %c0_16], %53 {strides = array<i32>} : memref<2x1x16x16xf32, #tpu.memory_space<vmem>>, vector<2x1x16x16xf32>,
    return
  }
  func.func @transform_0(%arg0: i32, %arg1: i32, %arg2: i32) -> (i32, i32, i32, i32) {
    %c0_i32 = arith.constant 0 : i32
    %c0_i32_0 = arith.constant 0 : i32
    return %arg1, %arg0, %arg2, %c0_i32 : i32, i32, i32, i32
  }
  func.func @transform_1(%arg0: i32, %arg1: i32, %arg2: i32) -> (i32, i32, i32) {
    %c0_i32 = arith.constant 0 : i32
    %c0_i32_0 = arith.constant 0 : i32
    %c0_i32_1 = arith.constant 0 : i32
    return %arg0, %c0_i32, %c0_i32_0 : i32, i32, i32
  }
  func.func @transform_2(%arg0: i32, %arg1: i32, %arg2: i32) -> (i32, i32, i32, i32) {
    %c0_i32 = arith.constant 0 : i32
    %c0_i32_0 = arith.constant 0 : i32
    return %arg1, %arg0, %arg2, %c0_i32 : i32, i32, i32, i32
  }
}

</mosaic_0001>

<llo_original>
// kernel: tpu_custom_call.1
$region0: #{tpu_custom_call.1}
  #allocation0 [shape = 'u32[]', space=smem, size = 0x4, offset = 0x4, fixed_abs, tag = 'smem constant byte address 0x4 - core index']
  #allocation1 [shape = 'u32[144,128]{1,0:T(1,128)}', space=vmem, size = 0x12000, scoped, tag = 'internal scratch']
  #allocation5 [shape = 's32[]', space=sflag, size = 0x4, offset = 0, fixed_abs, tag = 'sflag constant byte address 0x0 - dummy sync flag']
  %s0 = inlined_call_operand.vmem [shape: f32[2,4,16,32], index: 0, kind: input, shape index: {}]
  %s1 = inlined_call_operand.vmem [shape: f32[4,128,32], index: 1, kind: input, shape index: {}]
  %s2 = inlined_call_operand.hbm [shape: f32[2,4,16,16], index: 2, kind: output, shape index: {}]
  %s3 = sld [smem:[#allocation0]]
  $region79: #{tpu_custom_call.1} parent=0
    _
  %s5 = ssub.s32 1, %s3
  %s6 = scalar_select 0, %s5, %s3
  $region1: #{tpu_custom_call.1} parent=0
    #allocation2 [shape = 'u8[32768]{0}', space=vmem, size = 0x8000, scoped, tag = 'input window, operand 0']
    #allocation3 [shape = 'u8[32768]{0}', space=vmem, size = 0x8000, scoped, tag = 'output window, operand 0']
    #allocation4 [shape = 's32[2]{0}', space=sflag, size = 0x8, scoped, tag = 'scoped memory for tpu_custom_call.1']
    %7 = vsyncpa [#allocation4], 0
    %s8 = scalar_lea.sflag [#allocation4], 1
    %9 = vsyncpa %s8, 0
    loop: start=0, step=1, limit=6
    $region2: #{tpu_custom_call.1} parent=1 // loop_pre_header
      _
    $region3: #{tpu_custom_call.1} parent=1 // loop_header
      %s11 = sphi 0, %s15
      %p12 = scmp.ge.s32.totalorder %s11, 6
      %s18 = sphi 0, %s37
      %s19 = sphi 0, %s33
      %s20 = sphi 0, %s29
      %s21 = sphi 0, %s18
      %s22 = sphi 0, %s19
      %s23 = sphi 0, %s20
      %s24 = sphi 0, %s21
      %s25 = sphi 0, %s22
      %s26 = sphi 0, %s23
      %s44 = sphi 0, %s46
      %s47 = sphi 0, %s44
      %s48 = sphi 0, %s47
      %s64 = sphi 0, %s48
      %s70 = sphi 0, %s72
      %s73 = sphi 0, %s70
      %s74 = sphi 0, %s73
      %s90 = sphi 0, %s74
      %s100 = sphi 0, %s102
      %s103 = sphi 0, %s100
      %s104 = sphi 0, %s103
      %s120 = sphi 0, %s104
    $region4: #{tpu_custom_call.1} parent=1 // loop_header_branch
      %14 = sbr.rel (%p12) target = $region8
    $region5: #{tpu_custom_call.1} parent=1 // loop_body
      %s16 = ssub.s32 %s11, 1
      %s17 = ssub.s32 %s11, 2
      %s27 = sadd.s32 1, %s20
      %p28 = scmp.ge.s32.totalorder %s27, 1
      %s29 = scalar_select %p28, 0, %s27
      %s30 = sadd.s32 1, %s19
      %s31 = scalar_select %p28, %s30, %s19
      %p32 = scmp.ge.s32.totalorder %s31, 1
      %s33 = scalar_select %p32, 0, %s31
      %s34 = sadd.s32 1, %s18
      %s35 = scalar_select %p32, %s34, %s18
      %p36 = scmp.ge.s32.totalorder %s35, 4
      %s37 = scalar_select %p36, 0, %s35
      %s38 = ssub.s32 %s19, %s33
      %s39 = ssub.s32 %s18, %s37
      %s40 = sor.u32 %s38, %s39
      %s41 = ssub.s32 %s20, %s29
      %s42 = sor.u32 %s40, %s41
      %p43 = scmp.eq.s32.totalorder %s42, 0
      %s45 = sadd.s32 %s44, 1
      %s46 = scalar_select %p43, %s44, %s45
      %p49 = pneg %p43
      %p50 = scmp.eq.s32.totalorder %s11, 3
      %p51 = por %p49, %p50
      %p52 = scmp.ne.s32.totalorder %s44, %s47
      %p53 = scmp.eq.s32.totalorder %s11, 0
      %p54 = por %p52, %p53
      %p55 = scmp.ne.s32.totalorder %s44, %s47
      %p56 = scmp.eq.s32.totalorder %s16, 3
      %p57 = por %p55, %p56
      %p58 = scmp.ne.s32.totalorder %s47, %s48
      %p59 = scmp.eq.s32.totalorder %s16, 0
      %p60 = por %p58, %p59
      %p61 = scmp.ne.s32.totalorder %s47, %s48
      %p62 = scmp.eq.s32.totalorder %s17, 3
      %p63 = por %p61, %p62
      %p65 = scmp.ne.s32.totalorder %s48, %s64
      %p66 = scmp.eq.s32.totalorder %s17, 0
      %p67 = por %p65, %p66
      %s68 = ssub.s32 %s18, %s37
      %p69 = scmp.eq.s32.totalorder %s68, 0
      %s71 = sadd.s32 %s70, 1
      %s72 = scalar_select %p69, %s70, %s71
      %p75 = pneg %p69
      %p76 = scmp.eq.s32.totalorder %s11, 3
      %p77 = por %p75, %p76
      %p78 = scmp.ne.s32.totalorder %s70, %s73
      %p79 = scmp.eq.s32.totalorder %s11, 0
      %p80 = por %p78, %p79
      %p81 = scmp.ne.s32.totalorder %s70, %s73
      %p82 = scmp.eq.s32.totalorder %s16, 3
      %p83 = por %p81, %p82
      %p84 = scmp.ne.s32.totalorder %s73, %s74
      %p85 = scmp.eq.s32.totalorder %s16, 0
      %p86 = por %p84, %p85
      %p87 = scmp.ne.s32.totalorder %s73, %s74
      %p88 = scmp.eq.s32.totalorder %s17, 3
      %p89 = por %p87, %p88
      %p91 = scmp.ne.s32.totalorder %s74, %s90
      %p92 = scmp.eq.s32.totalorder %s17, 0
      %p93 = por %p91, %p92
      %s94 = ssub.s32 %s19, %s33
      %s95 = ssub.s32 %s18, %s37
      %s96 = sor.u32 %s94, %s95
      %s97 = ssub.s32 %s20, %s29
      %s98 = sor.u32 %s96, %s97
      %p99 = scmp.eq.s32.totalorder %s98, 0
      %s101 = sadd.s32 %s100, 1
      %s102 = scalar_select %p99, %s100, %s101
      %p105 = pneg %p99
      %p106 = scmp.eq.s32.totalorder %s11, 3
      %p107 = por %p105, %p106
      %p108 = scmp.ne.s32.totalorder %s100, %s103
      %p109 = scmp.eq.s32.totalorder %s11, 0
      %p110 = por %p108, %p109
      %p111 = scmp.ne.s32.totalorder %s100, %s103
      %p112 = scmp.eq.s32.totalorder %s16, 3
      %p113 = por %p111, %p112
      %p114 = scmp.ne.s32.totalorder %s103, %s104
      %p115 = scmp.eq.s32.totalorder %s16, 0
      %p116 = por %p114, %p115
      %p117 = scmp.ne.s32.totalorder %s103, %s104
      %p118 = scmp.eq.s32.totalorder %s17, 3
      %p119 = por %p117, %p118
      %p121 = scmp.ne.s32.totalorder %s104, %s120
      %p122 = scmp.eq.s32.totalorder %s17, 0
      %p123 = por %p121, %p122
      %p124 = scmp.le.s32.totalorder 1, %s11
      %p125 = scmp.lt.s32.totalorder %s11, 5
      %p126 = pnand %p124, %p125
      %p127 = pneg %p126
      // Predicated region
      $region9: #{tpu_custom_call.1} parent=5 // pred_check
        _
      $region10: #{tpu_custom_call.1} parent=5 // pred_check_branch
        %129 = sbr.rel (%p126) target = $region12
      $region11: #{tpu_custom_call.1} parent=5 // pred_region
        %s130 = ssub.s32 %s11, 1
      $region12: #{tpu_custom_call.1} parent=5 // pred_fallthru
        _
      %p131 = scmp.lt.s32.totalorder %s11, 4
      // Predicated region
      $region13: #{tpu_custom_call.1} parent=5 // pred_check
        %p132 = pneg %p131
      $region14: #{tpu_custom_call.1} parent=5 // pred_check_branch
        %134 = sbr.rel (%p132) target = $region16
      $region15: #{tpu_custom_call.1} parent=5 // pred_region
        // Predicated region
        $region17: #{tpu_custom_call.1} parent=15 // pred_check
          %p135 = pneg %p54
        $region18: #{tpu_custom_call.1} parent=15 // pred_check_branch
          %137 = sbr.rel (%p135) target = $region20
        $region19: #{tpu_custom_call.1} parent=15 // pred_region
          %s138 = sand.u32 %s44, 1
          %s139 = sand.u32 %s44, 1
          %s140 = smul.addr %s139, 32
          %s141 = scalar_lea.vmem [#allocation2], %s140
          %s142 = smul.u32 2, %s19
          %s143 = smul.u32 2, %s20
          %s144 = smul.addr %s18, 2
          %s145 = sadd.s32 %s143, %s144
          %s146 = smul.addr %s142, 8
          %s147 = sadd.s32 %s145, %s146
          %s148 = smul.addr %s147, 8
          %s149 = scalar_lea.vmem %s0, %s148
          // Predicated region
          $region21: #{tpu_custom_call.1} parent=19 // pred_check
            _
          $region22: #{tpu_custom_call.1} parent=19 // pred_check_branch
            %151 = sbr.rel (0) target = $region24
          $region23: #{tpu_custom_call.1} parent=19 // pred_region
            // Predicated region
            $region25: #{tpu_custom_call.1} parent=23 // pred_check
              _
            $region26: #{tpu_custom_call.1} parent=23 // pred_check_branch
              %153 = sbr.rel (0) target = $region28
            $region27: #{tpu_custom_call.1} parent=23 // pred_region
              // Predicated region
              $region40: #{tpu_custom_call.1} parent=27 // pred_check
                _
              $region41: #{tpu_custom_call.1} parent=27 // pred_check_branch
                %174 = sbr.rel (0) target = $region43
              $region42: #{tpu_custom_call.1} parent=27 // pred_region
                loop: start=0, step=1, limit=1
                $region44: #{tpu_custom_call.1} parent=42 // loop_pre_header
                  _
                $region45: #{tpu_custom_call.1} parent=42 // loop_header
                  %s176 = sphi 0, %s180
                  %p177 = scmp.ge.s32.totalorder %s176, 1
                  %s181 = sphi %s149, %s149
                  %s182 = sphi %s141, %s141
                $region46: #{tpu_custom_call.1} parent=42 // loop_header_branch
                  %179 = sbr.rel (%p177) target = $region50
                $region47: #{tpu_custom_call.1} parent=42 // loop_body
                  %v183 = vld [vmem:[%s181] sm:$0xff]
                  %184 = vst [vmem:[%s182] sm:$0xff] %v183
                  %v185 = vld [vmem:[%s181 + $0x8] sm:$0xff]
                  %186 = vst [vmem:[%s182 + $0x8] sm:$0xff] %v185
                  %v187 = vld [vmem:[%s181 + $0x40] sm:$0xff]
                  %188 = vst [vmem:[%s182 + $0x10] sm:$0xff] %v187
                  %v189 = vld [vmem:[%s181 + $0x48] sm:$0xff]
                  %190 = vst [vmem:[%s182 + $0x18] sm:$0xff] %v189
                $region48: #{tpu_custom_call.1} parent=42 // loop_footer
                  %s180 = sadd.s32 1, %s176
                $region49: #{tpu_custom_call.1} parent=42 // loop_footer_branch
                  %175 = sbr.rel target = $region45
                $region50: #{tpu_custom_call.1} parent=42 // loop_exit
                  _
              $region43: #{tpu_custom_call.1} parent=27 // pred_fallthru
                _
              // Predicated region
              $region51: #{tpu_custom_call.1} parent=27 // pred_check
                _
              $region52: #{tpu_custom_call.1} parent=27 // pred_check_branch
                %192 = sbr.rel target = $region54
              $region53: #{tpu_custom_call.1} parent=27 // pred_region
                _
              $region54: #{tpu_custom_call.1} parent=27 // pred_fallthru
                _
            $region28: #{tpu_custom_call.1} parent=23 // pred_fallthru
              _
            // Predicated region
            $region29: #{tpu_custom_call.1} parent=23 // pred_check
              _
            $region30: #{tpu_custom_call.1} parent=23 // pred_check_branch
              %155 = sbr.rel target = $region32
            $region31: #{tpu_custom_call.1} parent=23 // pred_region
              loop: start=0, step=1, limit=1
              $region33: #{tpu_custom_call.1} parent=31 // loop_pre_header
                _
              $region34: #{tpu_custom_call.1} parent=31 // loop_header
                %s158 = sphi 0, %s162
                %p159 = scmp.ge.s32.totalorder %s158, 1
                %s163 = sphi %s149, %s149
                %s164 = sphi %s141, %s141
              $region35: #{tpu_custom_call.1} parent=31 // loop_header_branch
                %161 = sbr.rel (%p159) target = $region39
              $region36: #{tpu_custom_call.1} parent=31 // loop_body
                %v165 = vld [vmem:[%s163] sm:$0xff]
                %166 = vst [vmem:[%s164] sm:$0xff] %v165
                %v167 = vld [vmem:[%s163 + $0x8] sm:$0xff]
                %168 = vst [vmem:[%s164 + $0x8] sm:$0xff] %v167
                %v169 = vld [vmem:[%s163 + $0x40] sm:$0xff]
                %170 = vst [vmem:[%s164 + $0x10] sm:$0xff] %v169
                %v171 = vld [vmem:[%s163 + $0x48] sm:$0xff]
                %172 = vst [vmem:[%s164 + $0x18] sm:$0xff] %v171
              $region37: #{tpu_custom_call.1} parent=31 // loop_footer
                %s162 = sadd.s32 1, %s158
              $region38: #{tpu_custom_call.1} parent=31 // loop_footer_branch
                %157 = sbr.rel target = $region34
              $region39: #{tpu_custom_call.1} parent=31 // loop_exit
                _
            $region32: #{tpu_custom_call.1} parent=23 // pred_fallthru
              _
          $region24: #{tpu_custom_call.1} parent=19 // pred_fallthru
            _
          %193 = vnop
        $region20: #{tpu_custom_call.1} parent=15 // pred_fallthru
          _
        // Predicated region
        $region55: #{tpu_custom_call.1} parent=15 // pred_check
          %p194 = pneg %p80
        $region56: #{tpu_custom_call.1} parent=15 // pred_check_branch
          %196 = sbr.rel (%p194) target = $region58
        $region57: #{tpu_custom_call.1} parent=15 // pred_region
          %p197 = scmp.lt.s32.totalorder %s18, 3
          %s198 = scalar_select %p197, %s18, 3
          %s199 = smul.addr %s198, 16
          %s200 = smul.addr %s199, 8
          %s201 = scalar_lea.vmem %s1, %s200
        $region58: #{tpu_custom_call.1} parent=15 // pred_fallthru
          _
      $region16: #{tpu_custom_call.1} parent=5 // pred_fallthru
        _
      %p202 = scmp.le.s32.totalorder 1, %s11
      %p203 = scmp.lt.s32.totalorder %s11, 5
      %p204 = pnand %p202, %p203
      %p205 = pneg %p204
      // Predicated region
      $region59: #{tpu_custom_call.1} parent=5 // pred_check
        _
      $region60: #{tpu_custom_call.1} parent=5 // pred_check_branch
        %207 = sbr.rel (%p204) target = $region62
      $region61: #{tpu_custom_call.1} parent=5 // pred_region
        %s208 = ssub.s32 %s11, 1
        %s209 = sand.u32 %s47, 1
        %s210 = sand.u32 %s47, 1
        %s211 = smul.addr %s210, 32
        %s212 = scalar_lea.vmem [#allocation2], %s211
        // Predicated region
        $region63: #{tpu_custom_call.1} parent=61 // pred_check
          %p213 = pneg %p60
        $region64: #{tpu_custom_call.1} parent=61 // pred_check_branch
          %215 = sbr.rel (%p213) target = $region66
        $region65: #{tpu_custom_call.1} parent=61 // pred_region
          _
        $region66: #{tpu_custom_call.1} parent=61 // pred_fallthru
          _
        %s216 = sand.u32 %s47, 1
        %s217 = sand.u32 %s47, 1
        %s218 = smul.addr %s217, 32
        %s219 = scalar_lea.vmem [#allocation2], %s218
        %p220 = pneg %p60
        %p221 = pneg %p57
        %p222 = scmp.lt.s32.totalorder %s21, 3
        %s223 = scalar_select %p222, %s21, 3
        %s224 = smul.addr %s223, 16
        %s225 = smul.addr %s224, 8
        %s226 = scalar_lea.vmem %s1, %s225
        %p227 = pneg %p86
        %p228 = pneg %p83
        %p229 = pneg %p116
        %p230 = pneg %p113
        %s231 = sand.u32 %s103, 1
        %s232 = scalar_lea.sflag [#allocation4], %s231
        %s233 = sand.u32 %s103, 1
        %s234 = smul.addr %s233, 32
        %s235 = scalar_lea.vmem [#allocation3], %s234
        %s236 = smul.u32 2, %s22
        %s237 = smul.u32 2, %s23
        %p238 = scmp.lt.s32.totalorder %s21, 3
        %s239 = scalar_select %p238, %s21, 3
        %s240 = smul.addr %s239, 16
        %s241 = smul.addr %s240, 8
        %s242 = scalar_lea.vmem %s1, %s241
        %s243 = smul.u32 2, %s22
        %s244 = smul.u32 2, %s23
        %v245 = vld [vmem:[%s212] sm:$0xff]
        %v246 = vld [vmem:[%s212 + $0x8] sm:$0xff]
        %v247 = vld [vmem:[%s212 + $0x10] sm:$0xff]
        %v248 = vld [vmem:[%s212 + $0x18] sm:$0xff]
        %v249 = vld [vmem:[%s242] sm:$0xff]
        %v250 = vld [vmem:[%s242 + $0x8] sm:$0xff]
        %v251 = vld [vmem:[%s242 + $0x10] sm:$0xff]
        %v252 = vld [vmem:[%s242 + $0x18] sm:$0xff]
        %v253 = vld [vmem:[%s242 + $0x20] sm:$0xff]
        %v254 = vld [vmem:[%s242 + $0x28] sm:$0xff]
        %v255 = vld [vmem:[%s242 + $0x30] sm:$0xff]
        %v256 = vld [vmem:[%s242 + $0x38] sm:$0xff]
        %v257 = vld [vmem:[%s242 + $0x40] sm:$0xff]
        %v258 = vld [vmem:[%s242 + $0x48] sm:$0xff]
        %v259 = vld [vmem:[%s242 + $0x50] sm:$0xff]
        %v260 = vld [vmem:[%s242 + $0x58] sm:$0xff]
        %v261 = vld [vmem:[%s242 + $0x60] sm:$0xff]
        %v262 = vld [vmem:[%s242 + $0x68] sm:$0xff]
        %v263 = vld [vmem:[%s242 + $0x70] sm:$0xff]
        %v264 = vld [vmem:[%s242 + $0x78] sm:$0xff]
        %vm265 = vcmask 261120
        %v267 = vsel %vm265, %v245, 0
        %v270 = vsel %vm265, %v246, 0
        %v273 = vsel %vm265, %v247, 0
        %v276 = vsel %vm265, %v248, 0
        %v279 = vsel %vm265, %v249, 0
        %v282 = vsel %vm265, %v250, 0
        %v285 = vsel %vm265, %v251, 0
        %v288 = vsel %vm265, %v252, 0
        %v291 = vsel %vm265, %v253, 0
        %v294 = vsel %vm265, %v254, 0
        %v297 = vsel %vm265, %v255, 0
        %v300 = vsel %vm265, %v256, 0
        %v303 = vsel %vm265, %v257, 0
        %v306 = vsel %vm265, %v258, 0
        %v309 = vsel %vm265, %v259, 0
        %v312 = vsel %vm265, %v260, 0
        %v315 = vsel %vm265, %v261, 0
        %v318 = vsel %vm265, %v262, 0
        %v321 = vsel %vm265, %v263, 0
        %v324 = vsel %vm265, %v264, 0
        %326 = vmatprep.subr.mxu0 0.0
        %327 = vmatpush1.xpose.msra.mxu0 %v279
        %328 = vmatprep.subr.mxu0 0.0
        %329 = vmatpush1.xpose.msra.mxu0 %v282
        %330 = vmatprep.subr.mxu0 0.0
        %331 = vmatpush1.xpose.msra.mxu0 %v285
        %332 = vmatprep.subr.mxu0 0.0
        %333 = vmatpush1.xpose.msra.mxu0 %v288
        %334 = vmatprep.subr.mxu0 0.0
        %335 = vmatpush1.xpose.msra.mxu0 %v291
        %336 = vmatprep.subr.mxu0 0.0
        %337 = vmatpush1.xpose.msra.mxu0 %v294
        %338 = vmatprep.subr.mxu0 0.0
        %339 = vmatpush1.xpose.msra.mxu0 %v297
        %340 = vmatprep.subr.mxu0 0.0
        %341 = vmatpush1.xpose.msra.mxu0 %v300
        %342 = vmatprep.subr.mxu0 0.0
        %343 = vmatpush1.xpose.msra.mxu0 %v303
        %344 = vmatprep.subr.mxu0 0.0
        %345 = vmatpush1.xpose.msra.mxu0 %v306
        %346 = vmatprep.subr.mxu0 0.0
        %347 = vmatpush1.xpose.msra.mxu0 %v309
        %348 = vmatprep.subr.mxu0 0.0
        %349 = vmatpush1.xpose.msra.mxu0 %v312
        %350 = vmatprep.subr.mxu0 0.0
        %351 = vmatpush1.xpose.msra.mxu0 %v315
        %352 = vmatprep.subr.mxu0 0.0
        %353 = vmatpush1.xpose.msra.mxu0 %v318
        %354 = vmatprep.subr.mxu0 0.0
        %355 = vmatpush1.xpose.msra.mxu0 %v321
        %356 = vmatprep.subr.mxu0 0.0
        %357 = vmatpush1.xpose.msra.mxu0 %v324
        %358 = vmatprep.subr.mxu0 0.0
        %359 = vmatpush1.xpose.msra.mxu0 0.0
        %360 = vmatprep.subr.mxu0 0.0
        %361 = vmatpush1.xpose.msra.mxu0 0.0
        %362 = vmatprep.subr.mxu0 0.0
        %363 = vmatpush1.xpose.msra.mxu0 0.0
        %364 = vmatprep.subr.mxu0 0.0
        %365 = vmatpush1.xpose.msra.mxu0 0.0
        %366 = vmatprep.subr.mxu0 0.0
        %367 = vmatpush1.xpose.msra.mxu0 0.0
        %368 = vmatprep.subr.mxu0 0.0
        %369 = vmatpush1.xpose.msra.mxu0 0.0
        %370 = vmatprep.subr.mxu0 0.0
        %371 = vmatpush1.xpose.msra.mxu0 0.0
        %372 = vmatprep.subr.mxu0 0.0
        %373 = vmatpush1.xpose.msra.mxu0 0.0
        %374 = vmatprep.subr.mxu0 0.0
        %375 = vmatpush1.xpose.msra.mxu0 0.0
        %376 = vmatprep.subr.mxu0 0.0
        %377 = vmatpush1.xpose.msra.mxu0 0.0
        %378 = vmatprep.subr.mxu0 0.0
        %379 = vmatpush1.xpose.msra.mxu0 0.0
        %380 = vmatprep.subr.mxu0 0.0
        %381 = vmatpush1.xpose.msra.mxu0 0.0
        %382 = vmatprep.subr.mxu0 0.0
        %383 = vmatpush1.xpose.msra.mxu0 0.0
        %384 = vmatprep.subr.mxu0 0.0
        %385 = vmatpush1.xpose.msra.mxu0 0.0
        %386 = vmatprep.subr.mxu0 0.0
        %387 = vmatpush1.xpose.msra.mxu0 0.0
        %388 = vmatprep.subr.mxu0 0.0
        %389 = vmatpush1.xpose.msra.mxu0 0.0
        %390 = vmatprep.mubr.f32.mxu0 0.0
        %391 = vmatmul.mubr.f32.gmra.mrb[0].mxu0 %v267
        %v392 = vpop.f32.mrb[0].mxu0
        %v393 = vadd.f32 0.0, %v392
        %v394 = vpop.f32.mrb[0].mxu0
        %395 = vmatprep.mubr.f32.mxu0 0.0
        %396 = vmatmul.mubr.f32.gmra.mrb[0].mxu0 %v270
        %v397 = vpop.f32.mrb[0].mxu0
        %v398 = vadd.f32 0.0, %v397
        %v399 = vpop.f32.mrb[0].mxu0
        %400 = vmatprep.mubr.f32.mxu0 0.0
        %401 = vmatmul.mubr.f32.gmra.mrb[0].mxu0 %v273
        %v402 = vpop.f32.mrb[0].mxu0
        %v403 = vadd.f32 0.0, %v402
        %v404 = vpop.f32.mrb[0].mxu0
        %405 = vmatprep.mubr.f32.mxu0 0.0
        %406 = vmatmul.mubr.f32.gmra.mrb[0].mxu0 %v276
        %v407 = vpop.f32.mrb[0].mxu0
        %v408 = vadd.f32 0.0, %v407
        %v409 = vpop.f32.mrb[0].mxu0
        %410 = vdwg.mxu0
        %v411 = vlaneseq
        %v412 = vshrl.u32 %v411, 7
        %v413 = vadd.s32 %v412, 8
        %v414 = vadd.s32 %v412, 16
        %v415 = vadd.s32 %v412, 24
        %vm416 = vcmp.lt.s32.totalorder %v412, 0
        %v417 = vsub.s32 0, %v412
        %v418 = vsel %vm416, %v417, %v412
        %v419 = vshrl.u32 %v418, 3
        %v420 = vand.u32 %v418, 7
        %v421 = vsub.s32 0, %v420
        %v422 = vsel %vm416, %v421, %v420
        %vm423 = vcmp.lt.s32.totalorder %v413, 0
        %v424 = vsub.s32 0, %v413
        %v425 = vsel %vm423, %v424, %v413
        %v426 = vshrl.u32 %v425, 3
        %v427 = vand.u32 %v425, 7
        %v428 = vsub.s32 0, %v427
        %v429 = vsel %vm423, %v428, %v427
        %vm430 = vcmp.lt.s32.totalorder %v414, 0
        %v431 = vsub.s32 0, %v414
        %v432 = vsel %vm430, %v431, %v414
        %v433 = vshrl.u32 %v432, 3
        %v434 = vand.u32 %v432, 7
        %v435 = vsub.s32 0, %v434
        %v436 = vsel %vm430, %v435, %v434
        %vm437 = vcmp.lt.s32.totalorder %v415, 0
        %v438 = vsub.s32 0, %v415
        %v439 = vsel %vm437, %v438, %v415
        %v440 = vshrl.u32 %v439, 3
        %v441 = vand.u32 %v439, 7
        %v442 = vsub.s32 0, %v441
        %v443 = vsel %vm437, %v442, %v441
        %vm444 = vcmp.ne.s32.totalorder %v422, 0
        %vm445 = vcmp.ne.s32.totalorder %v429, 0
        %vm446 = vcmp.ne.s32.totalorder %v436, 0
        %vm447 = vcmp.ne.s32.totalorder %v443, 0
        %vm448 = vcmp.lt.s32.totalorder %v422, 0
        %vm449 = vcmp.lt.s32.totalorder %v429, 0
        %vm450 = vcmp.lt.s32.totalorder %v436, 0
        %vm451 = vcmp.lt.s32.totalorder %v443, 0
        %vm452 = vmand %vm448, %vm444
        %vm453 = vmand %vm449, %vm445
        %vm454 = vmand %vm450, %vm446
        %vm455 = vmand %vm451, %vm447
        %v456 = vadd.s32 %v422, 8
        %v457 = vadd.s32 %v429, 8
        %v458 = vadd.s32 %v436, 8
        %v459 = vadd.s32 %v443, 8
        %v460 = vsel %vm452, %v456, %v422
        %v461 = vsel %vm453, %v457, %v429
        %v462 = vsel %vm454, %v458, %v436
        %v463 = vsel %vm455, %v459, %v443
        %v464 = vsub.s32 7, %v460
        %v465 = vsub.s32 7, %v461
        %v466 = vsub.s32 7, %v462
        %v467 = vsub.s32 7, %v463
        %v468 = vand.u32 %v464, 1
        %v469 = vand.u32 %v465, 1
        %v470 = vand.u32 %v466, 1
        %v471 = vand.u32 %v467, 1
        %vm472 = vcmp.ne.s32.totalorder %v468, 0
        %vm473 = vcmp.ne.s32.totalorder %v469, 0
        %vm474 = vcmp.ne.s32.totalorder %v470, 0
        %vm475 = vcmp.ne.s32.totalorder %v471, 0
        %v476 = vand.u32 %v464, 2
        %v477 = vand.u32 %v465, 2
        %v478 = vand.u32 %v466, 2
        %v479 = vand.u32 %v467, 2
        %vm480 = vcmp.ne.s32.totalorder %v476, 0
        %vm481 = vcmp.ne.s32.totalorder %v477, 0
        %vm482 = vcmp.ne.s32.totalorder %v478, 0
        %vm483 = vcmp.ne.s32.totalorder %v479, 0
        %v484 = vand.u32 %v464, 4
        %v485 = vand.u32 %v465, 4
        %v486 = vand.u32 %v466, 4
        %v487 = vand.u32 %v467, 4
        %vm488 = vcmp.ne.s32.totalorder %v484, 0
        %vm489 = vcmp.ne.s32.totalorder %v485, 0
        %vm490 = vcmp.ne.s32.totalorder %v486, 0
        %vm491 = vcmp.ne.s32.totalorder %v487, 0
        %492 = vrot.lane.b32.xlu0 %v393, 127
        %v493 = vpop.permute.xlu0 %492
        %494 = vrot.lane.b32.xlu0 %v398, 127
        %v495 = vpop.permute.xlu0 %494
        %496 = vrot.lane.b32.xlu0 %v403, 127
        %v497 = vpop.permute.xlu0 %496
        %498 = vrot.lane.b32.xlu0 %v408, 127
        %v499 = vpop.permute.xlu0 %498
        %v500 = vsel %vm472, 1, 0
        %v501 = vsel %vm473, 1, 0
        %v502 = vsel %vm474, 1, 0
        %v503 = vsel %vm475, 1, 0
        %vm504 = vcmp.eq.s32.totalorder %v500, 1
        %vm505 = vcmp.eq.s32.totalorder %v501, 1
        %vm506 = vcmp.eq.s32.totalorder %v502, 1
        %vm507 = vcmp.eq.s32.totalorder %v503, 1
        %v508 = vsel %vm504, %v493, %v393
        %v509 = vsel %vm505, %v495, %v398
        %v510 = vsel %vm506, %v497, %v403
        %v511 = vsel %vm507, %v499, %v408
        %512 = vrot.lane.b32.xlu0 %v508, 126
        %v513 = vpop.permute.xlu0 %512
        %514 = vrot.lane.b32.xlu0 %v509, 126
        %v515 = vpop.permute.xlu0 %514
        %516 = vrot.lane.b32.xlu0 %v510, 126
        %v517 = vpop.permute.xlu0 %516
        %518 = vrot.lane.b32.xlu0 %v511, 126
        %v519 = vpop.permute.xlu0 %518
        %v520 = vsel %vm480, 1, 0
        %v521 = vsel %vm481, 1, 0
        %v522 = vsel %vm482, 1, 0
        %v523 = vsel %vm483, 1, 0
        %vm524 = vcmp.eq.s32.totalorder %v520, 1
        %vm525 = vcmp.eq.s32.totalorder %v521, 1
        %vm526 = vcmp.eq.s32.totalorder %v522, 1
        %vm527 = vcmp.eq.s32.totalorder %v523, 1
        %v528 = vsel %vm524, %v513, %v508
        %v529 = vsel %vm525, %v515, %v509
        %v530 = vsel %vm526, %v517, %v510
        %v531 = vsel %vm527, %v519, %v511
        %532 = vrot.lane.b32.xlu0 %v528, 124
        %v533 = vpop.permute.xlu0 %532
        %534 = vrot.lane.b32.xlu0 %v529, 124
        %v535 = vpop.permute.xlu0 %534
        %536 = vrot.lane.b32.xlu0 %v530, 124
        %v537 = vpop.permute.xlu0 %536
        %538 = vrot.lane.b32.xlu0 %v531, 124
        %v539 = vpop.permute.xlu0 %538
        %v540 = vsel %vm488, 1, 0
        %v541 = vsel %vm489, 1, 0
        %v542 = vsel %vm490, 1, 0
        %v543 = vsel %vm491, 1, 0
        %vm544 = vcmp.eq.s32.totalorder %v540, 1
        %vm545 = vcmp.eq.s32.totalorder %v541, 1
        %vm546 = vcmp.eq.s32.totalorder %v542, 1
        %vm547 = vcmp.eq.s32.totalorder %v543, 1
        %v548 = vsel %vm544, %v533, %v528
        %v549 = vsel %vm545, %v535, %v529
        %v550 = vsel %vm546, %v537, %v530
        %v551 = vsel %vm547, %v539, %v531
        %vm552 = vcmask 130048
        %553 = vst.msk [vmem:[%s235] sm:$0xff] %vm552, %v548
        %554 = vst.msk [vmem:[%s235 + $0x8] sm:$0xff] %vm552, %v549
        %555 = vst.msk [vmem:[%s235 + $0x10] sm:$0xff] %vm552, %v550
        %556 = vst.msk [vmem:[%s235 + $0x18] sm:$0xff] %vm552, %v551
        %s557 = sand.u32 %s103, 1
        %s558 = scalar_lea.sflag [#allocation4], %s557
        %s559 = sand.u32 %s103, 1
        %s560 = smul.addr %s559, 32
        %s561 = scalar_lea.vmem [#allocation3], %s560
        // Predicated region
        $region67: #{tpu_custom_call.1} parent=61 // pred_check
          %p562 = pneg %p113
        $region68: #{tpu_custom_call.1} parent=61 // pred_check_branch
          %564 = sbr.rel (%p562) target = $region70
        $region69: #{tpu_custom_call.1} parent=61 // pred_region
          #allocation6 [shape = 'u32[6]{0}', space=smem, size = 0x18, scoped, tag = 'DMA stride descriptor']
          %s565 = smul.u32 2, %s22
          %s566 = smul.u32 2, %s23
          %s568 = ssub.s32 512, 512
          %569 = vsyncadd %s558, %s568
          %s570 = smul.addr %s21, 2
          %s571 = sadd.s32 %s566, %s570
          %s572 = smul.addr %s565, 8
          %s573 = sadd.s32 %s571, %s572
          %s574 = smul.addr %s573, 128
          %s575 = scalar_lea.hbm %s2, %s574
          %s577 = sshll.u32 1, 14
          %s578 = sxor.u32 4294967295, %s577
          %s581 = sshll.u32 7, 18
          %s582 = sxor.u32 4294967295, %s581
          %s583 = sand.u32 0, %s582
          %s585 = sor.u32 %s583, 0
          %s587 = sshll.u32 3, 24
          %s588 = sxor.u32 4294967295, %s587
          %s589 = sand.u32 %s585, %s588
          %s591 = sor.u32 %s589, 0
          %s592 = sshll.u32 %s561, 4
          %s593 = int_to_ptr.vmem [resolvable:$true] %s592
          %599 = sst [smem:[#allocation6]] 256
          %s600 = scalar_lea.smem [#allocation6], 1
          %601 = sst [smem:[%s600]] 1024
          %s602 = scalar_lea.smem [#allocation6], 2
          %603 = sst [smem:[%s602]] 2
          %s604 = scalar_lea.smem [#allocation6], 3
          %605 = sst [smem:[%s604]] 128
          %s606 = scalar_lea.smem [#allocation6], 4
          %607 = sst [smem:[%s606]] 128
          %s608 = scalar_lea.smem [#allocation6], 5
          %609 = sst [smem:[%s608]] 8
          %611 = dma.general %s593, 512, %s575, %s558, [#allocation5], [#allocation6], %s591, 0
        $region70: #{tpu_custom_call.1} parent=61 // pred_fallthru
          _
      $region62: #{tpu_custom_call.1} parent=5 // pred_fallthru
        _
      %p612 = scmp.le.s32.totalorder 2, %s11
      // Predicated region
      $region71: #{tpu_custom_call.1} parent=5 // pred_check
        %p613 = pneg %p612
      $region72: #{tpu_custom_call.1} parent=5 // pred_check_branch
        %615 = sbr.rel (%p613) target = $region74
      $region73: #{tpu_custom_call.1} parent=5 // pred_region
        %s616 = ssub.s32 %s11, 2
        // Predicated region
        $region75: #{tpu_custom_call.1} parent=73 // pred_check
          %p617 = pneg %p119
        $region76: #{tpu_custom_call.1} parent=73 // pred_check_branch
          %619 = sbr.rel (%p617) target = $region78
        $region77: #{tpu_custom_call.1} parent=73 // pred_region
          %s620 = sand.u32 %s104, 1
          %s621 = scalar_lea.sflag [#allocation4], %s620
          %s622 = sand.u32 %s104, 1
          %s623 = smul.addr %s622, 32
          %s624 = scalar_lea.vmem [#allocation3], %s623
          %625 = dma.done %s621, 512
        $region78: #{tpu_custom_call.1} parent=73 // pred_fallthru
          _
      $region74: #{tpu_custom_call.1} parent=5 // pred_fallthru
        _
    $region6: #{tpu_custom_call.1} parent=1 // loop_footer
      %s15 = sadd.s32 1, %s11
    $region7: #{tpu_custom_call.1} parent=1 // loop_footer_branch
      %10 = sbr.rel target = $region3
    $region8: #{tpu_custom_call.1} parent=1 // loop_exit
      _
    %626 = vsyncpa [#allocation4], 1
    %s627 = scalar_lea.sflag [#allocation4], 1
    %628 = vsyncpa %s627, 1

</llo_original>
